<compile_context>
chip_gen: v7x
topology: tpu7x:2x2x1
jax: 0.10.0
libtpu: 0.0.40
codegen_flags: <defaults>
</compile_context>

<pallas_src>
import jax
import jax.numpy as jnp
from jax import lax
from jax.experimental import pallas as pl
from jax.experimental.pallas import tpu as pltpu

EPS = 1e-5


def fused_decoder_kernel(x_ref, w1_ref, s1_ref, b1_ref,
                         w2_ref, s2_ref, b2_ref, o_ref):
    """Two fused Conv3x3 + BN + ReLU stages for NB batch elements.

    x_ref  : (NB, H, W*Cin)         activations, NHWC with (W, C) flattened
    w*_ref : (3*W*Cin_l, W*Cout_l)  ky-merged block-banded weights (bf16)
    s*/b*  : (1, W*Cout_l)          fused BN scale / bias (f32), tiled over W
    o_ref  : (NB, H, W*C2)          lane-dense output
    """
    nb, h, _ = x_ref.shape

    def conv_bn_relu(x, w_ref, s_ref, b_ref):
        # x: (NB, H, WC) float32.  One matmul with K = 3*WC (ky-merged);
        # width 'SAME' padding is already folded into the banded weights.
        wc = x.shape[-1]
        zrow = jnp.zeros((nb, 1, wc), jnp.float32)
        up = jnp.concatenate([zrow, x[:, :h - 1, :]], axis=1)   # input row h-1 (ky=0)
        dn = jnp.concatenate([x[:, 1:, :], zrow], axis=1)       # input row h+1 (ky=2)
        big = jnp.concatenate([up, x, dn], axis=-1)             # (NB, H, 3*WC)
        big = big.reshape(nb * h, 3 * wc).astype(w_ref.dtype)   # bf16 MXU operand
        acc = jnp.dot(big, w_ref[...],
                      preferred_element_type=jnp.float32)       # (NB*H, WCout) f32
        # BN scale/bias + ReLU epilogue stays in f32 (v5e VPU has no bf16 ALUs).
        y = jnp.maximum(acc * s_ref[0, :] + b_ref[0, :], 0.0)
        return y.reshape(nb, h, -1)

    y1 = conv_bn_relu(x_ref[...].astype(jnp.float32), w1_ref, s1_ref, b1_ref)
    # TODO(synk): training-mode Dropout2d (per-channel zeroing + 1/(1-p) scale)
    # not implemented; nn.Dropout2d is identity in eval(), which is what we model.
    y2 = conv_bn_relu(y1, w2_ref, s2_ref, b2_ref)
    o_ref[...] = y2.astype(o_ref.dtype)


def make_banded_weight(w_hwio, W):
    """(3,3,Cin,Cout) conv weight -> (3*W*Cin, W*Cout) ky-merged block-banded matrix.

    For kernel row ky, output column block xo receives input column blocks
    xo-1, xo, xo+1 through taps kx=0,1,2; out-of-range blocks are dropped,
    implementing 'SAME' zero padding along W inside the matmul.  The three
    per-ky bands are stacked along K so the whole conv row is one matmul.
    """
    Cin, Cout = w_hwio.shape[2], w_hwio.shape[3]
    xi = jnp.arange(W)
    kx = jnp.arange(3)
    xo = jnp.arange(W)
    sel = (xi[:, None, None] == xo[None, None, :] + kx[None, :, None] - 1)
    sel = sel.astype(w_hwio.dtype)                        # (W, 3, W)
    band = jnp.einsum("ixo,yxcd->yicod", sel, w_hwio)     # (3, W, Cin, W, Cout)
    return band.reshape(3 * W * Cin, W * Cout)


def prepare_decoder_params(p1, p2, W, matmul_dtype=jnp.bfloat16):
    """One-time parameter preprocessing (band + tile + cast).

    Call once per model and cache the result — do NOT rebuild per forward call.
    """
    w1, *_, s1, b1 = p1
    w2, *_, s2, b2 = p2
    C1 = w1.shape[3]
    C2 = w2.shape[3]
    # TODO(synk): for larger W / C the banded weight is only 3/W dense and its
    # size grows as W^2 (collides with v7x's 64 MiB VMEM first) — switch to
    # W-tiling with a 1-column halo (or per-tap K=Cin matmuls) at W >= 32.
    w1b = make_banded_weight(w1, W).astype(matmul_dtype)          # (3*W*Cin, W*C1)
    w2b = make_banded_weight(w2, W).astype(matmul_dtype)          # (3*W*C1,  W*C2)
    s1t = jnp.tile(s1, W).reshape(1, W * C1).astype(jnp.float32)
    b1t = jnp.tile(b1, W).reshape(1, W * C1).astype(jnp.float32)
    s2t = jnp.tile(s2, W).reshape(1, W * C2).astype(jnp.float32)
    b2t = jnp.tile(b2, W).reshape(1, W * C2).astype(jnp.float32)
    return w1b, s1t, b1t, w2b, s2t, b2t


def decoder_block_nhwc(x_flat, w1b, s1t, b1t, w2b, s2t, b2t):
    """x_flat: (N, H, W*Cin), NHWC with (W, C) flattened. Returns (N, H, W*C2)."""
    N, H, WCin = x_flat.shape
    WC1 = w1b.shape[1]
    WC2 = w2b.shape[1]
    # At most 2 grid steps: v7x's two TensorCores each take one "parallel"
    # block, while the batch inside each block is folded into the matmul M
    # dimension (M = NB*H) so single-TC v5e/v6e keep the MXU full too.
    n_blocks = 2 if (N % 2 == 0 and N >= 2) else 1
    NB = N // n_blocks

    return pl.pallas_call(
        fused_decoder_kernel,
        out_shape=jax.ShapeDtypeStruct((N, H, WC2), x_flat.dtype),
        grid_spec=pltpu.PrefetchScalarGridSpec(
            num_scalar_prefetch=0,
            grid=(n_blocks,),
            in_specs=[
                pl.BlockSpec((NB, H, WCin), lambda n: (n, 0, 0)),
                pl.BlockSpec((w1b.shape[0], WC1), lambda n: (0, 0)),
                pl.BlockSpec((1, WC1), lambda n: (0, 0)),
                pl.BlockSpec((1, WC1), lambda n: (0, 0)),
                pl.BlockSpec((w2b.shape[0], WC2), lambda n: (0, 0)),
                pl.BlockSpec((1, WC2), lambda n: (0, 0)),
                pl.BlockSpec((1, WC2), lambda n: (0, 0)),
            ],
            out_specs=pl.BlockSpec((NB, H, WC2), lambda n: (n, 0, 0)),
        ),
        compiler_params=pltpu.CompilerParams(
            dimension_semantics=("parallel",)),
    )(x_flat, w1b, s1t, b1t, w2b, s2t, b2t)


@jax.jit
def decoder_block(x_nchw, w1b, s1t, b1t, w2b, s2t, b2t):
    """PyTorch-convention adapter (NCHW in / NCHW out).

    In a real model keep activations NHWC (W*C flattened) across blocks and
    call decoder_block_nhwc directly; the two transposes here are model-
    boundary relayouts only, not per-block cost.
    """
    N, Cin, H, W = x_nchw.shape
    C2 = w2b.shape[1] // W
    x = jnp.transpose(x_nchw, (0, 2, 3, 1)).reshape(N, H, W * Cin)
    y = decoder_block_nhwc(x, w1b, s1t, b1t, w2b, s2t, b2t)
    return jnp.transpose(y.reshape(N, H, W, C2), (0, 3, 1, 2))


def make_params(key, in_channels, out_channels):
    """Deterministic parameters for one Conv2d+BN pair (eval mode)."""
    w = jax.random.normal(key, (3, 3, in_channels, out_channels), jnp.float32) * 0.1
    b_conv = 0.01 * jnp.arange(out_channels, dtype=jnp.float32)
    gamma = 1.0 + 0.10 * jnp.arange(out_channels, dtype=jnp.float32)
    beta = 0.05 * jnp.arange(out_channels, dtype=jnp.float32)
    running_mean = 0.02 * jnp.arange(out_channels, dtype=jnp.float32)
    running_var = 1.0 + 0.03 * jnp.arange(out_channels, dtype=jnp.float32)
    scale = gamma / jnp.sqrt(running_var + EPS)
    bias = beta + (b_conv - running_mean) * scale
    return w, b_conv, gamma, beta, running_mean, running_var, scale, bias


def reference_block(x_nchw, p1, p2):
    """Pure-JAX f32 reference (eval mode) for correctness checking."""
    def one(x, p):
        w, b_conv, gamma, beta, mean, var, _, _ = p
        y = lax.conv_general_dilated(
            x, w, window_strides=(1, 1), padding="SAME",
            dimension_numbers=("NHWC", "HWIO", "NHWC")) + b_conv
        y = gamma * (y - mean) / jnp.sqrt(var + EPS) + beta
        return jnp.maximum(y, 0.0)

    x = jnp.transpose(x_nchw, (0, 2, 3, 1))
    y = one(x, p1)
    y = one(y, p2)
    return jnp.transpose(y, (0, 3, 1, 2))


if __name__ == "__main__":
    N, CIN, COUT, H, W = 2, 4, 8, 16, 16

    root = jax.random.PRNGKey(0)
    kx, k1, k2 = jax.random.split(root, 3)

    x = jax.random.normal(kx, (N, CIN, H, W), jnp.float32)  # PyTorch NCHW input
    p1 = make_params(k1, CIN, COUT)
    p2 = make_params(k2, COUT, COUT)

    # One-time parameter preprocessing (cache this in a real model).
    prep = prepare_decoder_params(p1, p2, W)

    out = jax.block_until_ready(decoder_block(x, *prep))
    ref = jax.block_until_ready(reference_block(x, p1, p2))

    assert out.shape == (N, COUT, H, W), out.shape
    # bf16 matmul operands (f32 accumulation) -> looser tolerance than the
    # all-f32 variant; structural bugs would show errors O(0.1-1).
    assert jnp.allclose(out, ref, atol=5e-2, rtol=5e-2), "mismatch vs reference"

    print("KERNEL_OK")
</pallas_src>

<mosaic_0001>
module attributes {stable_mosaic.version = 11 : i64} {
  func.func @fused_decoder_kernel(%arg0: i32, %arg1: memref<1x16x64xf32, #tpu.memory_space<vmem>>, %arg2: memref<192x128xbf16, #tpu.memory_space<vmem>>, %arg3: memref<1x128xf32, #tpu.memory_space<vmem>>, %arg4: memref<1x128xf32, #tpu.memory_space<vmem>>, %arg5: memref<384x128xbf16, #tpu.memory_space<vmem>>, %arg6: memref<1x128xf32, #tpu.memory_space<vmem>>, %arg7: memref<1x128xf32, #tpu.memory_space<vmem>>, %arg8: memref<1x16x128xf32, #tpu.memory_space<vmem>>) attributes {dimension_semantics = [#tpu.dimension_semantics<parallel>], iteration_bounds = array<i64: 2>, scalar_prefetch = 0 : i64, scratch_operands = 0 : i64, tpu.core_type = #tpu.core_type<tc>, window_params = [{transform_indices = @transform_0, window_bounds = array<i64: 1, 16, 64>}, {pipeline_mode = #tpu.pipeline_mode<synchronous>, transform_indices = @transform_1, window_bounds = array<i64: 192, 128>}, {pipeline_mode = #tpu.pipeline_mode<synchronous>, transform_indices = @transform_2, window_bounds = array<i64: 1, 128>}, {pipeline_mode = #tpu.pipeline_mode<synchronous>, transform_indices = @transform_3, window_bounds = array<i64: 1, 128>}, {pipeline_mode = #tpu.pipeline_mode<synchronous>, transform_indices = @transform_4, window_bounds = array<i64: 384, 128>}, {pipeline_mode = #tpu.pipeline_mode<synchronous>, transform_indices = @transform_5, window_bounds = array<i64: 1, 128>}, {pipeline_mode = #tpu.pipeline_mode<synchronous>, transform_indices = @transform_6, window_bounds = array<i64: 1, 128>}, {transform_indices = @transform_7, window_bounds = array<i64: 1, 16, 128>}]} {
    %c0 = arith.constant 0 : index
    %c0_0 = arith.constant 0 : index
    %c0_1 = arith.constant 0 : index
    %0 = vector.load %arg1[%c0, %c0_0, %c0_1] : memref<1x16x64xf32, #tpu.memory_space<vmem>>, vector<1x16x64xf32>
    %cst = arith.constant 0.000000e+00 : f32
    %1 = vector.broadcast %cst : f32 to vector<1x1x64xf32>
    %2 = vector.extract_strided_slice %0 {offsets = [0, 0, 0], sizes = [1, 15, 64], strides = [1, 1, 1]} : vector<1x16x64xf32> to vector<1x15x64xf32>
    %3 = tpu.concatenate %1, %2 in 1 : vector<1x1x64xf32>, vector<1x15x64xf32> -> vector<1x16x64xf32>
    %4 = vector.extract_strided_slice %0 {offsets = [0, 1, 0], sizes = [1, 15, 64], strides = [1, 1, 1]} : vector<1x16x64xf32> to vector<1x15x64xf32>
    %5 = tpu.concatenate %4, %1 in 1 : vector<1x15x64xf32>, vector<1x1x64xf32> -> vector<1x16x64xf32>
    %6 = tpu.concatenate %3, %0, %5 in 2 : vector<1x16x64xf32>, vector<1x16x64xf32>, vector<1x16x64xf32> -> vector<1x16x192xf32>
    %7 = vector.shape_cast %6 : vector<1x16x192xf32> to vector<16x192xf32>
    %8 = arith.truncf %7 : vector<16x192xf32> to vector<16x192xbf16>
    %c0_2 = arith.constant 0 : index
    %c0_3 = arith.constant 0 : index
    %9 = vector.load %arg2[%c0_2, %c0_3] : memref<192x128xbf16, #tpu.memory_space<vmem>>, vector<192x128xbf16>
    %cst_4 = arith.constant dense<0.000000e+00> : vector<16x128xf32>
    %10 = tpu.matmul %8, %9, %cst_4 {dimension_numbers = #tpu.dot_dimension_numbers<[1], [0], [0], [1], [0, 0, 1, 1], [], []>} : vector<16x192xbf16>, vector<192x128xbf16>, vector<16x128xf32> -> vector<16x128xf32>
    %c0_5 = arith.constant 0 : index
    %c0_6 = arith.constant 0 : index
    %11 = vector.load %arg3[%c0_5, %c0_6] : memref<1x128xf32, #tpu.memory_space<vmem>>, vector<1x128xf32>
    %12 = vector.shape_cast %11 : vector<1x128xf32> to vector<128xf32>
    %13 = vector.shape_cast %12 : vector<128xf32> to vector<1x128xf32>
    %14 = vector.broadcast %13 : vector<1x128xf32> to vector<16x128xf32>
    %15 = arith.mulf %10, %14 : vector<16x128xf32>
    %c0_7 = arith.constant 0 : index
    %c0_8 = arith.constant 0 : index
    %16 = vector.load %arg4[%c0_7, %c0_8] : memref<1x128xf32, #tpu.memory_space<vmem>>, vector<1x128xf32>
    %17 = vector.shape_cast %16 : vector<1x128xf32> to vector<128xf32>
    %18 = vector.shape_cast %17 : vector<128xf32> to vector<1x128xf32>
    %19 = vector.broadcast %18 : vector<1x128xf32> to vector<16x128xf32>
    %20 = arith.addf %15, %19 : vector<16x128xf32>
    %cst_9 = arith.constant 0.000000e+00 : f32
    %21 = vector.broadcast %cst_9 : f32 to vector<16x128xf32>
    %22 = arith.maximumf %20, %21 : vector<16x128xf32>
    %23 = vector.shape_cast %22 : vector<16x128xf32> to vector<1x16x128xf32>
    %cst_10 = arith.constant 0.000000e+00 : f32
    %24 = vector.broadcast %cst_10 : f32 to vector<1x1x128xf32>
    %25 = vector.extract_strided_slice %23 {offsets = [0, 0, 0], sizes = [1, 15, 128], strides = [1, 1, 1]} : vector<1x16x128xf32> to vector<1x15x128xf32>
    %26 = tpu.concatenate %24, %25 in 1 : vector<1x1x128xf32>, vector<1x15x128xf32> -> vector<1x16x128xf32>
    %27 = vector.extract_strided_slice %23 {offsets = [0, 1, 0], sizes = [1, 15, 128], strides = [1, 1, 1]} : vector<1x16x128xf32> to vector<1x15x128xf32>
    %28 = tpu.concatenate %27, %24 in 1 : vector<1x15x128xf32>, vector<1x1x128xf32> -> vector<1x16x128xf32>
    %29 = tpu.concatenate %26, %23, %28 in 2 : vector<1x16x128xf32>, vector<1x16x128xf32>, vector<1x16x128xf32> -> vector<1x16x384xf32>
    %30 = vector.shape_cast %29 : vector<1x16x384xf32> to vector<16x384xf32>
    %31 = arith.truncf %30 : vector<16x384xf32> to vector<16x384xbf16>
    %c0_11 = arith.constant 0 : index
    %c0_12 = arith.constant 0 : index
    %32 = vector.load %arg5[%c0_11, %c0_12] : memref<384x128xbf16, #tpu.memory_space<vmem>>, vector<384x128xbf16>
    %cst_13 = arith.constant dense<0.000000e+00> : vector<16x128xf32>
    %33 = tpu.matmul %31, %32, %cst_13 {dimension_numbers = #tpu.dot_dimension_numbers<[1], [0], [0], [1], [0, 0, 1, 1], [], []>} : vector<16x384xbf16>, vector<384x128xbf16>, vector<16x128xf32> -> vector<16x128xf32>
    %c0_14 = arith.constant 0 : index
    %c0_15 = arith.constant 0 : index
    %34 = vector.load %arg6[%c0_14, %c0_15] : memref<1x128xf32, #tpu.memory_space<vmem>>, vector<1x128xf32>
    %35 = vector.shape_cast %34 : vector<1x128xf32> to vector<128xf32>
    %36 = vector.shape_cast %35 : vector<128xf32> to vector<1x128xf32>
    %37 = vector.broadcast %36 : vector<1x128xf32> to vector<16x128xf32>
    %38 = arith.mulf %33, %37 : vector<16x128xf32>
    %c0_16 = arith.constant 0 : index
    %c0_17 = arith.constant 0 : index
    %39 = vector.load %arg7[%c0_16, %c0_17] : memref<1x128xf32, #tpu.memory_space<vmem>>, vector<1x128xf32>
    %40 = vector.shape_cast %39 : vector<1x128xf32> to vector<128xf32>
    %41 = vector.shape_cast %40 : vector<128xf32> to vector<1x128xf32>
    %42 = vector.broadcast %41 : vector<1x128xf32> to vector<16x128xf32>
    %43 = arith.addf %38, %42 : vector<16x128xf32>
    %cst_18 = arith.constant 0.000000e+00 : f32
    %44 = vector.broadcast %cst_18 : f32 to vector<16x128xf32>
    %45 = arith.maximumf %43, %44 : vector<16x128xf32>
    %46 = vector.shape_cast %45 : vector<16x128xf32> to vector<1x16x128xf32>
    %c0_19 = arith.constant 0 : index
    %c0_20 = arith.constant 0 : index
    %c0_21 = arith.constant 0 : index
    %47 = vector.load %arg8[%c0_19, %c0_20, %c0_21] : memref<1x16x128xf32, #tpu.memory_space<vmem>>, vector<1x16x128xf32>
    tpu.vector_store %arg8[%c0_19, %c0_20, %c0_21], %46 {strides = array<i32>} : memref<1x16x128xf32, #tpu.memory_space<vmem>>, vector<1x16x128xf32>,
    return
  }
  func.func @transform_0(%arg0: i32) -> (i32, i32, i32) {
    %c0_i32 = arith.constant 0 : i32
    %c0_i32_0 = arith.constant 0 : i32
    %c0_i32_1 = arith.constant 0 : i32
    return %arg0, %c0_i32, %c0_i32_0 : i32, i32, i32
  }
  func.func @transform_1(%arg0: i32) -> (i32, i32) {
    %c0_i32 = arith.constant 0 : i32
    %c0_i32_0 = arith.constant 0 : i32
    %c0_i32_1 = arith.constant 0 : i32
    return %c0_i32, %c0_i32_0 : i32, i32
  }
  func.func @transform_2(%arg0: i32) -> (i32, i32) {
    %c0_i32 = arith.constant 0 : i32
    %c0_i32_0 = arith.constant 0 : i32
    %c0_i32_1 = arith.constant 0 : i32
    return %c0_i32, %c0_i32_0 : i32, i32
  }
  func.func @transform_3(%arg0: i32) -> (i32, i32) {
    %c0_i32 = arith.constant 0 : i32
    %c0_i32_0 = arith.constant 0 : i32
    %c0_i32_1 = arith.constant 0 : i32
    return %c0_i32, %c0_i32_0 : i32, i32
  }
  func.func @transform_4(%arg0: i32) -> (i32, i32) {
    %c0_i32 = arith.constant 0 : i32
    %c0_i32_0 = arith.constant 0 : i32
    %c0_i32_1 = arith.constant 0 : i32
    return %c0_i32, %c0_i32_0 : i32, i32
  }
  func.func @transform_5(%arg0: i32) -> (i32, i32) {
    %c0_i32 = arith.constant 0 : i32
    %c0_i32_0 = arith.constant 0 : i32
    %c0_i32_1 = arith.constant 0 : i32
    return %c0_i32, %c0_i32_0 : i32, i32
  }
  func.func @transform_6(%arg0: i32) -> (i32, i32) {
    %c0_i32 = arith.constant 0 : i32
    %c0_i32_0 = arith.constant 0 : i32
    %c0_i32_1 = arith.constant 0 : i32
    return %c0_i32, %c0_i32_0 : i32, i32
  }
  func.func @transform_7(%arg0: i32) -> (i32, i32, i32) {
    %c0_i32 = arith.constant 0 : i32
    %c0_i32_0 = arith.constant 0 : i32
    %c0_i32_1 = arith.constant 0 : i32
    return %arg0, %c0_i32, %c0_i32_0 : i32, i32, i32
  }
}

</mosaic_0001>

<llo_original>
// kernel: decoder_block.1
$region0: #{decoder_block.1}
  #allocation0 [shape = 'u32[]', space=smem, size = 0x4, offset = 0x4, fixed_abs, tag = 'smem constant byte address 0x4 - core index']
  #allocation1 [shape = 'u32[144,128]{1,0:T(1,128)}', space=vmem, size = 0x12000, scoped, tag = 'internal scratch']
  %s0 = inlined_call_operand.vmem [shape: f32[2,16,64], index: 0, kind: input, shape index: {}]
  %s1 = inlined_call_operand.vmem [shape: bf16[192,128], index: 1, kind: input, shape index: {}]
  %s2 = inlined_call_operand.vmem [shape: f32[1,128], index: 2, kind: input, shape index: {}]
  %s3 = inlined_call_operand.vmem [shape: f32[1,128], index: 3, kind: input, shape index: {}]
  %s4 = inlined_call_operand.vmem [shape: bf16[384,128], index: 4, kind: input, shape index: {}]
  %s5 = inlined_call_operand.vmem [shape: f32[1,128], index: 5, kind: input, shape index: {}]
  %s6 = inlined_call_operand.vmem [shape: f32[1,128], index: 6, kind: input, shape index: {}]
  %s7 = inlined_call_operand.vmem [shape: f32[2,16,128], index: 7, kind: output, shape index: {}]
  %s8 = sld [smem:[#allocation0]]
  $region61: #{decoder_block.1} parent=0
    _
  %s10 = ssub.s32 1, %s8
  %s11 = scalar_select 0, %s10, %s8
  loop: start=0, step=1, limit=4
  $region2: #{decoder_block.1} parent=0 // loop_pre_header
    _
  $region3: #{decoder_block.1} parent=0 // loop_header
    %s13 = sphi 0, %s17
    %p14 = scmp.ge.s32.totalorder %s13, 4
    %s23 = sphi 0, %s25
    %s26 = sphi 0, %s23
    %s27 = sphi 0, %s26
    %s43 = sphi 0, %s27
    %s47 = sphi 0, %s47
    %s49 = sphi 0, %s47
    %s50 = sphi 0, %s49
    %s64 = sphi 0, %s50
    %s68 = sphi 0, %s68
    %s70 = sphi 0, %s68
    %s71 = sphi 0, %s70
    %s85 = sphi 0, %s71
    %s89 = sphi 0, %s89
    %s91 = sphi 0, %s89
    %s92 = sphi 0, %s91
    %s106 = sphi 0, %s92
    %s110 = sphi 0, %s110
    %s112 = sphi 0, %s110
    %s113 = sphi 0, %s112
    %s127 = sphi 0, %s113
    %s131 = sphi 0, %s131
    %s133 = sphi 0, %s131
    %s134 = sphi 0, %s133
    %s148 = sphi 0, %s134
    %s152 = sphi 0, %s152
    %s154 = sphi 0, %s152
    %s155 = sphi 0, %s154
    %s169 = sphi 0, %s155
    %s175 = sphi 0, %s177
    %s178 = sphi 0, %s175
    %s179 = sphi 0, %s178
    %s195 = sphi 0, %s179
  $region4: #{decoder_block.1} parent=0 // loop_header_branch
    %16 = sbr.rel (%p14) target = $region8
  $region5: #{decoder_block.1} parent=0 // loop_body
    %s18 = ssub.s32 %s13, 1
    %s19 = ssub.s32 %s13, 2
    %s20 = sadd.s32 %s13, 1
    %s21 = ssub.s32 %s13, %s20
    %p22 = scmp.eq.s32.totalorder %s21, 0
    %s24 = sadd.s32 %s23, 1
    %s25 = scalar_select %p22, %s23, %s24
    %p28 = pneg %p22
    %p29 = scmp.eq.s32.totalorder %s13, 1
    %p30 = por %p28, %p29
    %p31 = scmp.ne.s32.totalorder %s23, %s26
    %p32 = scmp.eq.s32.totalorder %s13, 0
    %p33 = por %p31, %p32
    %p34 = scmp.ne.s32.totalorder %s23, %s26
    %p35 = scmp.eq.s32.totalorder %s18, 1
    %p36 = por %p34, %p35
    %p37 = scmp.ne.s32.totalorder %s26, %s27
    %p38 = scmp.eq.s32.totalorder %s18, 0
    %p39 = por %p37, %p38
    %p40 = scmp.ne.s32.totalorder %s26, %s27
    %p41 = scmp.eq.s32.totalorder %s19, 1
    %p42 = por %p40, %p41
    %p44 = scmp.ne.s32.totalorder %s27, %s43
    %p45 = scmp.eq.s32.totalorder %s19, 0
    %p46 = por %p44, %p45
    %s48 = sadd.s32 %s47, 1
    %p51 = scmp.eq.s32.totalorder %s13, 1
    %p52 = scmp.ne.s32.totalorder %s47, %s49
    %p53 = scmp.eq.s32.totalorder %s13, 0
    %p54 = por %p52, %p53
    %p55 = scmp.ne.s32.totalorder %s47, %s49
    %p56 = scmp.eq.s32.totalorder %s18, 1
    %p57 = por %p55, %p56
    %p58 = scmp.ne.s32.totalorder %s49, %s50
    %p59 = scmp.eq.s32.totalorder %s18, 0
    %p60 = por %p58, %p59
    %p61 = scmp.ne.s32.totalorder %s49, %s50
    %p62 = scmp.eq.s32.totalorder %s19, 1
    %p63 = por %p61, %p62
    %p65 = scmp.ne.s32.totalorder %s50, %s64
    %p66 = scmp.eq.s32.totalorder %s19, 0
    %p67 = por %p65, %p66
    %s69 = sadd.s32 %s68, 1
    %p72 = scmp.eq.s32.totalorder %s13, 1
    %p73 = scmp.ne.s32.totalorder %s68, %s70
    %p74 = scmp.eq.s32.totalorder %s13, 0
    %p75 = por %p73, %p74
    %p76 = scmp.ne.s32.totalorder %s68, %s70
    %p77 = scmp.eq.s32.totalorder %s18, 1
    %p78 = por %p76, %p77
    %p79 = scmp.ne.s32.totalorder %s70, %s71
    %p80 = scmp.eq.s32.totalorder %s18, 0
    %p81 = por %p79, %p80
    %p82 = scmp.ne.s32.totalorder %s70, %s71
    %p83 = scmp.eq.s32.totalorder %s19, 1
    %p84 = por %p82, %p83
    %p86 = scmp.ne.s32.totalorder %s71, %s85
    %p87 = scmp.eq.s32.totalorder %s19, 0
    %p88 = por %p86, %p87
    %s90 = sadd.s32 %s89, 1
    %p93 = scmp.eq.s32.totalorder %s13, 1
    %p94 = scmp.ne.s32.totalorder %s89, %s91
    %p95 = scmp.eq.s32.totalorder %s13, 0
    %p96 = por %p94, %p95
    %p97 = scmp.ne.s32.totalorder %s89, %s91
    %p98 = scmp.eq.s32.totalorder %s18, 1
    %p99 = por %p97, %p98
    %p100 = scmp.ne.s32.totalorder %s91, %s92
    %p101 = scmp.eq.s32.totalorder %s18, 0
    %p102 = por %p100, %p101
    %p103 = scmp.ne.s32.totalorder %s91, %s92
    %p104 = scmp.eq.s32.totalorder %s19, 1
    %p105 = por %p103, %p104
    %p107 = scmp.ne.s32.totalorder %s92, %s106
    %p108 = scmp.eq.s32.totalorder %s19, 0
    %p109 = por %p107, %p108
    %s111 = sadd.s32 %s110, 1
    %p114 = scmp.eq.s32.totalorder %s13, 1
    %p115 = scmp.ne.s32.totalorder %s110, %s112
    %p116 = scmp.eq.s32.totalorder %s13, 0
    %p117 = por %p115, %p116
    %p118 = scmp.ne.s32.totalorder %s110, %s112
    %p119 = scmp.eq.s32.totalorder %s18, 1
    %p120 = por %p118, %p119
    %p121 = scmp.ne.s32.totalorder %s112, %s113
    %p122 = scmp.eq.s32.totalorder %s18, 0
    %p123 = por %p121, %p122
    %p124 = scmp.ne.s32.totalorder %s112, %s113
    %p125 = scmp.eq.s32.totalorder %s19, 1
    %p126 = por %p124, %p125
    %p128 = scmp.ne.s32.totalorder %s113, %s127
    %p129 = scmp.eq.s32.totalorder %s19, 0
    %p130 = por %p128, %p129
    %s132 = sadd.s32 %s131, 1
    %p135 = scmp.eq.s32.totalorder %s13, 1
    %p136 = scmp.ne.s32.totalorder %s131, %s133
    %p137 = scmp.eq.s32.totalorder %s13, 0
    %p138 = por %p136, %p137
    %p139 = scmp.ne.s32.totalorder %s131, %s133
    %p140 = scmp.eq.s32.totalorder %s18, 1
    %p141 = por %p139, %p140
    %p142 = scmp.ne.s32.totalorder %s133, %s134
    %p143 = scmp.eq.s32.totalorder %s18, 0
    %p144 = por %p142, %p143
    %p145 = scmp.ne.s32.totalorder %s133, %s134
    %p146 = scmp.eq.s32.totalorder %s19, 1
    %p147 = por %p145, %p146
    %p149 = scmp.ne.s32.totalorder %s134, %s148
    %p150 = scmp.eq.s32.totalorder %s19, 0
    %p151 = por %p149, %p150
    %s153 = sadd.s32 %s152, 1
    %p156 = scmp.eq.s32.totalorder %s13, 1
    %p157 = scmp.ne.s32.totalorder %s152, %s154
    %p158 = scmp.eq.s32.totalorder %s13, 0
    %p159 = por %p157, %p158
    %p160 = scmp.ne.s32.totalorder %s152, %s154
    %p161 = scmp.eq.s32.totalorder %s18, 1
    %p162 = por %p160, %p161
    %p163 = scmp.ne.s32.totalorder %s154, %s155
    %p164 = scmp.eq.s32.totalorder %s18, 0
    %p165 = por %p163, %p164
    %p166 = scmp.ne.s32.totalorder %s154, %s155
    %p167 = scmp.eq.s32.totalorder %s19, 1
    %p168 = por %p166, %p167
    %p170 = scmp.ne.s32.totalorder %s155, %s169
    %p171 = scmp.eq.s32.totalorder %s19, 0
    %p172 = por %p170, %p171
    %s173 = ssub.s32 %s13, %s20
    %p174 = scmp.eq.s32.totalorder %s173, 0
    %s176 = sadd.s32 %s175, 1
    %s177 = scalar_select %p174, %s175, %s176
    %p180 = pneg %p174
    %p181 = scmp.eq.s32.totalorder %s13, 1
    %p182 = por %p180, %p181
    %p183 = scmp.ne.s32.totalorder %s175, %s178
    %p184 = scmp.eq.s32.totalorder %s13, 0
    %p185 = por %p183, %p184
    %p186 = scmp.ne.s32.totalorder %s175, %s178
    %p187 = scmp.eq.s32.totalorder %s18, 1
    %p188 = por %p186, %p187
    %p189 = scmp.ne.s32.totalorder %s178, %s179
    %p190 = scmp.eq.s32.totalorder %s18, 0
    %p191 = por %p189, %p190
    %p192 = scmp.ne.s32.totalorder %s178, %s179
    %p193 = scmp.eq.s32.totalorder %s19, 1
    %p194 = por %p192, %p193
    %p196 = scmp.ne.s32.totalorder %s179, %s195
    %p197 = scmp.eq.s32.totalorder %s19, 0
    %p198 = por %p196, %p197
    %p199 = scmp.le.s32.totalorder 1, %s13
    %p200 = scmp.lt.s32.totalorder %s13, 3
    %p201 = pnand %p199, %p200
    %p202 = pneg %p201
    // Predicated region
    $region9: #{decoder_block.1} parent=5 // pred_check
      _
    $region10: #{decoder_block.1} parent=5 // pred_check_branch
      %204 = sbr.rel (%p201) target = $region12
    $region11: #{decoder_block.1} parent=5 // pred_region
      %s205 = ssub.s32 %s13, 1
      // Predicated region
      $region13: #{decoder_block.1} parent=11 // pred_check
        %p206 = pneg %p60
      $region14: #{decoder_block.1} parent=11 // pred_check_branch
        %208 = sbr.rel (%p206) target = $region16
      $region15: #{decoder_block.1} parent=11 // pred_region
        _
      $region16: #{decoder_block.1} parent=11 // pred_fallthru
        _
      // Predicated region
      $region17: #{decoder_block.1} parent=11 // pred_check
        %p209 = pneg %p81
      $region18: #{decoder_block.1} parent=11 // pred_check_branch
        %211 = sbr.rel (%p209) target = $region20
      $region19: #{decoder_block.1} parent=11 // pred_region
        _
      $region20: #{decoder_block.1} parent=11 // pred_fallthru
        _
      // Predicated region
      $region21: #{decoder_block.1} parent=11 // pred_check
        %p212 = pneg %p102
      $region22: #{decoder_block.1} parent=11 // pred_check_branch
        %214 = sbr.rel (%p212) target = $region24
      $region23: #{decoder_block.1} parent=11 // pred_region
        _
      $region24: #{decoder_block.1} parent=11 // pred_fallthru
        _
      // Predicated region
      $region25: #{decoder_block.1} parent=11 // pred_check
        %p215 = pneg %p123
      $region26: #{decoder_block.1} parent=11 // pred_check_branch
        %217 = sbr.rel (%p215) target = $region28
      $region27: #{decoder_block.1} parent=11 // pred_region
        _
      $region28: #{decoder_block.1} parent=11 // pred_fallthru
        _
      // Predicated region
      $region29: #{decoder_block.1} parent=11 // pred_check
        %p218 = pneg %p144
      $region30: #{decoder_block.1} parent=11 // pred_check_branch
        %220 = sbr.rel (%p218) target = $region32
      $region31: #{decoder_block.1} parent=11 // pred_region
        _
      $region32: #{decoder_block.1} parent=11 // pred_fallthru
        _
      // Predicated region
      $region33: #{decoder_block.1} parent=11 // pred_check
        %p221 = pneg %p165
      $region34: #{decoder_block.1} parent=11 // pred_check_branch
        %223 = sbr.rel (%p221) target = $region36
      $region35: #{decoder_block.1} parent=11 // pred_region
        _
      $region36: #{decoder_block.1} parent=11 // pred_fallthru
        _
    $region12: #{decoder_block.1} parent=5 // pred_fallthru
      _
    %p224 = scmp.lt.s32.totalorder %s13, 2
    // Predicated region
    $region37: #{decoder_block.1} parent=5 // pred_check
      %p225 = pneg %p224
    $region38: #{decoder_block.1} parent=5 // pred_check_branch
      %227 = sbr.rel (%p225) target = $region40
    $region39: #{decoder_block.1} parent=5 // pred_region
      // Predicated region
      $region41: #{decoder_block.1} parent=39 // pred_check
        %p228 = pneg %p33
      $region42: #{decoder_block.1} parent=39 // pred_check_branch
        %230 = sbr.rel (%p228) target = $region44
      $region43: #{decoder_block.1} parent=39 // pred_region
        %p231 = scmp.lt.s32.totalorder %s13, 1
        %s232 = scalar_select %p231, %s13, 1
        %s233 = smul.addr %s232, 2
        %s234 = smul.addr %s233, 8
        %s235 = scalar_lea.vmem %s0, %s234
      $region44: #{decoder_block.1} parent=39 // pred_fallthru
        _
    $region40: #{decoder_block.1} parent=5 // pred_fallthru
      _
    %p236 = scmp.le.s32.totalorder 1, %s13
    %p237 = scmp.lt.s32.totalorder %s13, 3
    %p238 = pnand %p236, %p237
    %p239 = pneg %p238
    // Predicated region
    $region45: #{decoder_block.1} parent=5 // pred_check
      _
    $region46: #{decoder_block.1} parent=5 // pred_check_branch
      %241 = sbr.rel (%p238) target = $region48
    $region47: #{decoder_block.1} parent=5 // pred_region
      %s242 = ssub.s32 %s13, 1
      %p243 = scmp.lt.s32.totalorder %s18, 1
      %s244 = scalar_select %p243, %s18, 1
      %s245 = smul.addr %s244, 2
      %s246 = smul.addr %s245, 8
      %s247 = scalar_lea.vmem %s0, %s246
      %p248 = pneg %p39
      %p249 = pneg %p36
      %p250 = pneg %p60
      %p251 = pneg %p57
      %p252 = pneg %p81
      %p253 = pneg %p78
      %p254 = pneg %p102
      %p255 = pneg %p99
      %p256 = pneg %p123
      %p257 = pneg %p120
      %p258 = pneg %p144
      %p259 = pneg %p141
      %p260 = pneg %p165
      %p261 = pneg %p162
      %p262 = pneg %p191
      %p263 = pneg %p188
      %p264 = scmp.lt.s32.totalorder %s18, 1
      %s265 = scalar_select %p264, %s18, 1
      %s266 = smul.addr %s265, 2
      %s267 = smul.addr %s266, 8
      %s268 = scalar_lea.vmem %s7, %s267
      %p269 = scmp.lt.s32.totalorder %s18, 1
      %s270 = scalar_select %p269, %s18, 1
      %s271 = smul.addr %s270, 2
      %s272 = smul.addr %s271, 8
      %s273 = scalar_lea.vmem %s0, %s272
      %p274 = scmp.lt.s32.totalorder %s18, 1
      %s275 = scalar_select %p274, %s18, 1
      %s276 = smul.addr %s275, 2
      %s277 = smul.addr %s276, 8
      %s278 = scalar_lea.vmem %s7, %s277
      %v280 = vld [vmem:[%s273] sm:$0xff]
      %v281 = vld [vmem:[%s273 + $0x8] sm:$0xff]
      %vm284 = vcmask 1040384
      %v285 = vrot.slane %v280, 7
      %v286 = vrot.slane %v281, 7
      %v287 = vsel %vm284, %v285, %v286
      %v290 = vsel %vm284, 0.0, %v285
      %vm291 = vcmask 1046528
      %v292 = vrot.slane %v280, 1
      %v293 = vrot.slane %v281, 1
      %v294 = vsel %vm291, %v292, %v293
      %v297 = vsel %vm291, %v293, 0.0
      %298 = vrot.lane.b32.xlu0 %v280, 64
      %v299 = vpop.permute.xlu0 %298
      %300 = vrot.lane.b32.xlu0 %v281, 64
      %v301 = vpop.permute.xlu0 %300
      %vm304 = vcmask 523264
      %v305 = vsel %vm304, %v290, %v299
      %v306 = vsel %vm304, %v287, %v301
      %v307 = vpack.c.bf16 %v306, %v305
      %v308 = vpack.c.bf16 %v297, %v294
      %v309 = vld [vmem:[%s1] sm:$0xf]
      %v310 = vld [vmem:[%s1 + $0x4] sm:$0xf]
      %v311 = vld [vmem:[%s1 + $0x8] sm:$0xf]
      %v312 = vld [vmem:[%s1 + $0xc] sm:$0xf]
      %v313 = vld [vmem:[%s1 + $0x10] sm:$0xf]
      %v314 = vld [vmem:[%s1 + $0x14] sm:$0xf]
      %v315 = vld [vmem:[%s1 + $0x18] sm:$0xf]
      %v316 = vld [vmem:[%s1 + $0x1c] sm:$0xf]
      %v317 = vld [vmem:[%s1 + $0x20] sm:$0xf]
      %v318 = vld [vmem:[%s1 + $0x24] sm:$0xf]
      %v319 = vld [vmem:[%s1 + $0x28] sm:$0xf]
      %v320 = vld [vmem:[%s1 + $0x2c] sm:$0xf]
      %v321 = vld [vmem:[%s1 + $0x30] sm:$0xf]
      %v322 = vld [vmem:[%s1 + $0x34] sm:$0xf]
      %v323 = vld [vmem:[%s1 + $0x38] sm:$0xf]
      %v324 = vld [vmem:[%s1 + $0x3c] sm:$0xf]
      %v325 = vld [vmem:[%s1 + $0x40] sm:$0xf]
      %v326 = vld [vmem:[%s1 + $0x44] sm:$0xf]
      %v327 = vld [vmem:[%s1 + $0x48] sm:$0xf]
      %v328 = vld [vmem:[%s1 + $0x4c] sm:$0xf]
      %v329 = vld [vmem:[%s1 + $0x50] sm:$0xf]
      %v330 = vld [vmem:[%s1 + $0x54] sm:$0xf]
      %v331 = vld [vmem:[%s1 + $0x58] sm:$0xf]
      %v332 = vld [vmem:[%s1 + $0x5c] sm:$0xf]
      %v357 = vunpack.c.l.b16 %v309
      %v358 = vunpack.c.l.b16 %v310
      %v359 = vunpack.c.l.b16 %v311
      %v360 = vunpack.c.l.b16 %v312
      %v361 = vunpack.c.l.b16 %v313
      %v362 = vunpack.c.l.b16 %v314
      %v363 = vunpack.c.l.b16 %v315
      %v364 = vunpack.c.l.b16 %v316
      %v365 = vunpack.c.l.b16 %v317
      %v366 = vunpack.c.l.b16 %v318
      %v367 = vunpack.c.l.b16 %v319
      %v368 = vunpack.c.l.b16 %v320
      %v369 = vunpack.c.l.b16 %v321
      %v370 = vunpack.c.l.b16 %v322
      %v371 = vunpack.c.l.b16 %v323
      %v372 = vunpack.c.l.b16 %v324
      %v373 = vunpack.c.l.b16 %v325
      %v374 = vunpack.c.l.b16 %v326
      %v375 = vunpack.c.l.b16 %v327
      %v376 = vunpack.c.l.b16 %v328
      %v377 = vunpack.c.l.b16 %v329
      %v378 = vunpack.c.l.b16 %v330
      %v379 = vunpack.c.l.b16 %v331
      %v380 = vunpack.c.l.b16 %v332
      %v381 = vpack.c.b16 %v358, %v357
      %v382 = vpack.c.b16 %v360, %v359
      %v383 = vpack.c.b16 %v362, %v361
      %v384 = vpack.c.b16 %v364, %v363
      %v385 = vpack.c.b16 %v366, %v365
      %v386 = vpack.c.b16 %v368, %v367
      %v387 = vpack.c.b16 %v370, %v369
      %v388 = vpack.c.b16 %v372, %v371
      %v389 = vpack.c.b16 %v374, %v373
      %v390 = vpack.c.b16 %v376, %v375
      %v391 = vpack.c.b16 %v378, %v377
      %v392 = vpack.c.b16 %v380, %v379
      %v406 = vsel %vm304, %v308, 0
      %408 = vmatprep.subr.bf16.mxu0 0
      %409 = vmatpush1.bf16.msra.mxu0 %v381
      %410 = vmatprep.subr.bf16.mxu0 0
      %411 = vmatpush1.bf16.msra.mxu0 %v382
      %412 = vmatprep.subr.bf16.mxu0 0
      %413 = vmatpush1.bf16.msra.mxu0 %v383
      %414 = vmatprep.subr.bf16.mxu0 0
      %415 = vmatpush1.bf16.msra.mxu0 %v384
      %416 = vmatprep.subr.bf16.mxu0 0
      %417 = vmatpush1.bf16.msra.mxu0 %v385
      %418 = vmatprep.subr.bf16.mxu0 0
      %419 = vmatpush1.bf16.msra.mxu0 %v386
      %420 = vmatprep.subr.bf16.mxu0 0
      %421 = vmatpush1.bf16.msra.mxu0 %v387
      %422 = vmatprep.subr.bf16.mxu0 0
      %423 = vmatpush1.bf16.msra.mxu0 %v388
      %424 = vmatprep.subr.bf16.mxu0 0
      %425 = vmatpush1.bf16.msra.mxu0 %v389
      %426 = vmatprep.subr.bf16.mxu0 0
      %427 = vmatpush1.bf16.msra.mxu0 %v390
      %428 = vmatprep.subr.bf16.mxu0 0
      %429 = vmatpush1.bf16.msra.mxu0 %v391
      %430 = vmatprep.subr.bf16.mxu0 0
      %431 = vmatpush1.bf16.msra.mxu0 %v392
      %432 = vmatprep.subr.bf16.mxu0 0
      %433 = vmatpush1.bf16.msra.mxu0 0
      %434 = vmatprep.subr.bf16.mxu0 0
      %435 = vmatpush1.bf16.msra.mxu0 0
      %436 = vmatprep.subr.bf16.mxu0 0
      %437 = vmatpush1.bf16.msra.mxu0 0
      %438 = vmatprep.subr.bf16.mxu0 0
      %439 = vmatpush1.bf16.msra.mxu0 0
      %440 = vmatprep.mubr.bf16.mxu0 %v406
      %441 = vmatmul.mubr.bf16.gmra.mrb[0].mxu0 %v307
      %v442 = vpop.f32.mrb[0].mxu0
      %v443 = vadd.f32 0.0, %v442
      %v444 = vpop.f32.mrb[0].mxu0
      %v445 = vpop.f32.mrb[0].mxu0
      %v446 = vadd.f32 0.0, %v445
      %v447 = vpop.f32.mrb[0].mxu0
      %448 = vdwg.mxu0
      %v449 = vld [vmem:[%s2] sm:$0x1]
      %v451 = vlaneseq
      %v452 = vshrl.u32 %v451, 7
      %v453 = vsub.s32 0, %v452
      %v454 = vrot.slane %v449, %v453
      %v456 = vmul.f32 %v443, %v454
      %v457 = vmul.f32 %v446, %v454
      %v458 = vld [vmem:[%s3] sm:$0x1]
      %v460 = vlaneseq
      %v461 = vshrl.u32 %v460, 7
      %v462 = vsub.s32 0, %v461
      %v463 = vrot.slane %v458, %v462
      %v465 = vadd.f32 %v456, %v463
      %v466 = vadd.f32 %v457, %v463
      %v467 = vmax.f32 %v465, 0.0
      %v468 = vmax.f32 %v466, 0.0
      %v471 = vrot.slane %v467, 7
      %v472 = vrot.slane %v468, 7
      %v473 = vsel %vm284, %v471, %v472
      %v476 = vsel %vm284, 0.0, %v471
      %v477 = vrot.slane %v467, 1
      %v478 = vrot.slane %v468, 1
      %v479 = vsel %vm291, %v477, %v478
      %v482 = vsel %vm291, %v478, 0.0
      %v483 = vpack.c.bf16 %v473, %v476
      %v484 = vpack.c.bf16 %v468, %v467
      %v485 = vpack.c.bf16 %v482, %v479
      %v486 = vld [vmem:[%s4] sm:$0xf]
      %v487 = vld [vmem:[%s4 + $0x4] sm:$0xf]
      %v488 = vld [vmem:[%s4 + $0x8] sm:$0xf]
      %v489 = vld [vmem:[%s4 + $0xc] sm:$0xf]
      %v490 = vld [vmem:[%s4 + $0x10] sm:$0xf]
      %v491 = vld [vmem:[%s4 + $0x14] sm:$0xf]
      %v492 = vld [vmem:[%s4 + $0x18] sm:$0xf]
      %v493 = vld [vmem:[%s4 + $0x1c] sm:$0xf]
      %v494 = vld [vmem:[%s4 + $0x20] sm:$0xf]
      %v495 = vld [vmem:[%s4 + $0x24] sm:$0xf]
      %v496 = vld [vmem:[%s4 + $0x28] sm:$0xf]
      %v497 = vld [vmem:[%s4 + $0x2c] sm:$0xf]
      %v498 = vld [vmem:[%s4 + $0x30] sm:$0xf]
      %v499 = vld [vmem:[%s4 + $0x34] sm:$0xf]
      %v500 = vld [vmem:[%s4 + $0x38] sm:$0xf]
      %v501 = vld [vmem:[%s4 + $0x3c] sm:$0xf]
      %v502 = vld [vmem:[%s4 + $0x40] sm:$0xf]
      %v503 = vld [vmem:[%s4 + $0x44] sm:$0xf]
      %v504 = vld [vmem:[%s4 + $0x48] sm:$0xf]
      %v505 = vld [vmem:[%s4 + $0x4c] sm:$0xf]
      %v506 = vld [vmem:[%s4 + $0x50] sm:$0xf]
      %v507 = vld [vmem:[%s4 + $0x54] sm:$0xf]
      %v508 = vld [vmem:[%s4 + $0x58] sm:$0xf]
      %v509 = vld [vmem:[%s4 + $0x5c] sm:$0xf]
      %v510 = vld [vmem:[%s4 + $0x60] sm:$0xf]
      %v511 = vld [vmem:[%s4 + $0x64] sm:$0xf]
      %v512 = vld [vmem:[%s4 + $0x68] sm:$0xf]
      %v513 = vld [vmem:[%s4 + $0x6c] sm:$0xf]
      %v514 = vld [vmem:[%s4 + $0x70] sm:$0xf]
      %v515 = vld [vmem:[%s4 + $0x74] sm:$0xf]
      %v516 = vld [vmem:[%s4 + $0x78] sm:$0xf]
      %v517 = vld [vmem:[%s4 + $0x7c] sm:$0xf]
      %v518 = vld [vmem:[%s4 + $0x80] sm:$0xf]
      %v519 = vld [vmem:[%s4 + $0x84] sm:$0xf]
      %v520 = vld [vmem:[%s4 + $0x88] sm:$0xf]
      %v521 = vld [vmem:[%s4 + $0x8c] sm:$0xf]
      %v522 = vld [vmem:[%s4 + $0x90] sm:$0xf]
      %v523 = vld [vmem:[%s4 + $0x94] sm:$0xf]
      %v524 = vld [vmem:[%s4 + $0x98] sm:$0xf]
      %v525 = vld [vmem:[%s4 + $0x9c] sm:$0xf]
      %v526 = vld [vmem:[%s4 + $0xa0] sm:$0xf]
      %v527 = vld [vmem:[%s4 + $0xa4] sm:$0xf]
      %v528 = vld [vmem:[%s4 + $0xa8] sm:$0xf]
      %v529 = vld [vmem:[%s4 + $0xac] sm:$0xf]
      %v530 = vld [vmem:[%s4 + $0xb0] sm:$0xf]
      %v531 = vld [vmem:[%s4 + $0xb4] sm:$0xf]
      %v532 = vld [vmem:[%s4 + $0xb8] sm:$0xf]
      %v533 = vld [vmem:[%s4 + $0xbc] sm:$0xf]
      %v582 = vunpack.c.l.b16 %v486
      %v583 = vunpack.c.l.b16 %v487
      %v584 = vunpack.c.l.b16 %v488
      %v585 = vunpack.c.l.b16 %v489
      %v586 = vunpack.c.l.b16 %v490
      %v587 = vunpack.c.l.b16 %v491
      %v588 = vunpack.c.l.b16 %v492
      %v589 = vunpack.c.l.b16 %v493
      %v590 = vunpack.c.l.b16 %v494
      %v591 = vunpack.c.l.b16 %v495
      %v592 = vunpack.c.l.b16 %v496
      %v593 = vunpack.c.l.b16 %v497
      %v594 = vunpack.c.l.b16 %v498
      %v595 = vunpack.c.l.b16 %v499
      %v596 = vunpack.c.l.b16 %v500
      %v597 = vunpack.c.l.b16 %v501
      %v598 = vunpack.c.l.b16 %v502
      %v599 = vunpack.c.l.b16 %v503
      %v600 = vunpack.c.l.b16 %v504
      %v601 = vunpack.c.l.b16 %v505
      %v602 = vunpack.c.l.b16 %v506
      %v603 = vunpack.c.l.b16 %v507
      %v604 = vunpack.c.l.b16 %v508
      %v605 = vunpack.c.l.b16 %v509
      %v606 = vunpack.c.l.b16 %v510
      %v607 = vunpack.c.l.b16 %v511
      %v608 = vunpack.c.l.b16 %v512
      %v609 = vunpack.c.l.b16 %v513
      %v610 = vunpack.c.l.b16 %v514
      %v611 = vunpack.c.l.b16 %v515
      %v612 = vunpack.c.l.b16 %v516
      %v613 = vunpack.c.l.b16 %v517
      %v614 = vunpack.c.l.b16 %v518
      %v615 = vunpack.c.l.b16 %v519
      %v616 = vunpack.c.l.b16 %v520
      %v617 = vunpack.c.l.b16 %v521
      %v618 = vunpack.c.l.b16 %v522
      %v619 = vunpack.c.l.b16 %v523
      %v620 = vunpack.c.l.b16 %v524
      %v621 = vunpack.c.l.b16 %v525
      %v622 = vunpack.c.l.b16 %v526
      %v623 = vunpack.c.l.b16 %v527
      %v624 = vunpack.c.l.b16 %v528
      %v625 = vunpack.c.l.b16 %v529
      %v626 = vunpack.c.l.b16 %v530
      %v627 = vunpack.c.l.b16 %v531
      %v628 = vunpack.c.l.b16 %v532
      %v629 = vunpack.c.l.b16 %v533
      %v630 = vpack.c.b16 %v583, %v582
      %v631 = vpack.c.b16 %v585, %v584
      %v632 = vpack.c.b16 %v587, %v586
      %v633 = vpack.c.b16 %v589, %v588
      %v634 = vpack.c.b16 %v591, %v590
      %v635 = vpack.c.b16 %v593, %v592
      %v636 = vpack.c.b16 %v595, %v594
      %v637 = vpack.c.b16 %v597, %v596
      %v638 = vpack.c.b16 %v599, %v598
      %v639 = vpack.c.b16 %v601, %v600
      %v640 = vpack.c.b16 %v603, %v602
      %v641 = vpack.c.b16 %v605, %v604
      %v642 = vpack.c.b16 %v607, %v606
      %v643 = vpack.c.b16 %v609, %v608
      %v644 = vpack.c.b16 %v611, %v610
      %v645 = vpack.c.b16 %v613, %v612
      %v646 = vpack.c.b16 %v615, %v614
      %v647 = vpack.c.b16 %v617, %v616
      %v648 = vpack.c.b16 %v619, %v618
      %v649 = vpack.c.b16 %v621, %v620
      %v650 = vpack.c.b16 %v623, %v622
      %v651 = vpack.c.b16 %v625, %v624
      %v652 = vpack.c.b16 %v627, %v626
      %v653 = vpack.c.b16 %v629, %v628
      %678 = vmatprep.subr.bf16.mxu0 0
      %679 = vmatpush1.bf16.msra.mxu0 %v630
      %680 = vmatprep.subr.bf16.mxu0 0
      %681 = vmatpush1.bf16.msra.mxu0 %v631
      %682 = vmatprep.subr.bf16.mxu0 0
      %683 = vmatpush1.bf16.msra.mxu0 %v632
      %684 = vmatprep.subr.bf16.mxu0 0
      %685 = vmatpush1.bf16.msra.mxu0 %v633
      %686 = vmatprep.subr.bf16.mxu0 0
      %687 = vmatpush1.bf16.msra.mxu0 %v634
      %688 = vmatprep.subr.bf16.mxu0 0
      %689 = vmatpush1.bf16.msra.mxu0 %v635
      %690 = vmatprep.subr.bf16.mxu0 0
      %691 = vmatpush1.bf16.msra.mxu0 %v636
      %692 = vmatprep.subr.bf16.mxu0 0
      %693 = vmatpush1.bf16.msra.mxu0 %v637
      %694 = vmatprep.subr.bf16.mxu0 0
      %695 = vmatpush1.bf16.msra.mxu0 %v638
      %696 = vmatprep.subr.bf16.mxu0 0
      %697 = vmatpush1.bf16.msra.mxu0 %v639
      %698 = vmatprep.subr.bf16.mxu0 0
      %699 = vmatpush1.bf16.msra.mxu0 %v640
      %700 = vmatprep.subr.bf16.mxu0 0
      %701 = vmatpush1.bf16.msra.mxu0 %v641
      %702 = vmatprep.subr.bf16.mxu0 0
      %703 = vmatpush1.bf16.msra.mxu0 %v642
      %704 = vmatprep.subr.bf16.mxu0 0
      %705 = vmatpush1.bf16.msra.mxu0 %v643
      %706 = vmatprep.subr.bf16.mxu0 0
      %707 = vmatpush1.bf16.msra.mxu0 %v644
      %708 = vmatprep.subr.bf16.mxu0 0
      %709 = vmatpush1.bf16.msra.mxu0 %v645
      %710 = vmatprep.mubr.bf16.mxu0 %v484
      %711 = vmatmul.mubr.bf16.gmra.mrb[0].mxu0 %v483
      %v712 = vpop.f32.mrb[0].mxu0
      %v713 = vadd.f32 0.0, %v712
      %v714 = vpop.f32.mrb[0].mxu0
      %v715 = vpop.f32.mrb[0].mxu0
      %v716 = vadd.f32 0.0, %v715
      %v717 = vpop.f32.mrb[0].mxu0
      %718 = vdwg.mxu0
      %719 = vmatprep.subr.bf16.mxu0 0
      %720 = vmatpush1.bf16.msra.mxu0 %v646
      %721 = vmatprep.subr.bf16.mxu0 0
      %722 = vmatpush1.bf16.msra.mxu0 %v647
      %723 = vmatprep.subr.bf16.mxu0 0
      %724 = vmatpush1.bf16.msra.mxu0 %v648
      %725 = vmatprep.subr.bf16.mxu0 0
      %726 = vmatpush1.bf16.msra.mxu0 %v649
      %727 = vmatprep.subr.bf16.mxu0 0
      %728 = vmatpush1.bf16.msra.mxu0 %v650
      %729 = vmatprep.subr.bf16.mxu0 0
      %730 = vmatpush1.bf16.msra.mxu0 %v651
      %731 = vmatprep.subr.bf16.mxu0 0
      %732 = vmatpush1.bf16.msra.mxu0 %v652
      %733 = vmatprep.subr.bf16.mxu0 0
      %734 = vmatpush1.bf16.msra.mxu0 %v653
      %735 = vmatprep.subr.bf16.mxu0 0
      %736 = vmatpush1.bf16.msra.mxu0 0
      %737 = vmatprep.subr.bf16.mxu0 0
      %738 = vmatpush1.bf16.msra.mxu0 0
      %739 = vmatprep.subr.bf16.mxu0 0
      %740 = vmatpush1.bf16.msra.mxu0 0
      %741 = vmatprep.subr.bf16.mxu0 0
      %742 = vmatpush1.bf16.msra.mxu0 0
      %743 = vmatprep.subr.bf16.mxu0 0
      %744 = vmatpush1.bf16.msra.mxu0 0
      %745 = vmatprep.subr.bf16.mxu0 0
      %746 = vmatpush1.bf16.msra.mxu0 0
      %747 = vmatprep.subr.bf16.mxu0 0
      %748 = vmatpush1.bf16.msra.mxu0 0
      %749 = vmatprep.subr.bf16.mxu0 0
      %750 = vmatpush1.bf16.msra.mxu0 0
      %751 = vmatprep.mubr.bf16.mxu0 0
      %752 = vmatmul.mubr.bf16.gmra.mrb[0].mxu0 %v485
      %v753 = vpop.f32.mrb[0].mxu0
      %v754 = vadd.f32 %v713, %v753
      %v755 = vpop.f32.mrb[0].mxu0
      %v756 = vpop.f32.mrb[0].mxu0
      %v757 = vadd.f32 %v716, %v756
      %v758 = vpop.f32.mrb[0].mxu0
      %759 = vdwg.mxu0
      %v760 = vld [vmem:[%s5] sm:$0x1]
      %v762 = vlaneseq
      %v763 = vshrl.u32 %v762, 7
      %v764 = vsub.s32 0, %v763
      %v765 = vrot.slane %v760, %v764
      %v767 = vmul.f32 %v754, %v765
      %v768 = vmul.f32 %v757, %v765
      %v769 = vld [vmem:[%s6] sm:$0x1]
      %v771 = vlaneseq
      %v772 = vshrl.u32 %v771, 7
      %v773 = vsub.s32 0, %v772
      %v774 = vrot.slane %v769, %v773
      %v776 = vadd.f32 %v767, %v774
      %v777 = vadd.f32 %v768, %v774
      %v778 = vmax.f32 %v776, 0.0
      %v779 = vmax.f32 %v777, 0.0
      %780 = vst [vmem:[%s278] sm:$0xff] %v778
      %781 = vst [vmem:[%s278 + $0x8] sm:$0xff] %v779
      %p782 = scmp.lt.s32.totalorder %s18, 1
      %s783 = scalar_select %p782, %s18, 1
      %s784 = smul.addr %s783, 2
      %s785 = smul.addr %s784, 8
      %s786 = scalar_lea.vmem %s7, %s785
      // Predicated region
      $region49: #{decoder_block.1} parent=47 // pred_check
        %p787 = pneg %p188
      $region50: #{decoder_block.1} parent=47 // pred_check_branch
        %789 = sbr.rel (%p787) target = $region52
      $region51: #{decoder_block.1} parent=47 // pred_region
        _
      $region52: #{decoder_block.1} parent=47 // pred_fallthru
        _
    $region48: #{decoder_block.1} parent=5 // pred_fallthru
      _
    %p790 = scmp.le.s32.totalorder 2, %s13
    // Predicated region
    $region53: #{decoder_block.1} parent=5 // pred_check
      %p791 = pneg %p790
    $region54: #{decoder_block.1} parent=5 // pred_check_branch
      %793 = sbr.rel (%p791) target = $region56
    $region55: #{decoder_block.1} parent=5 // pred_region
      %s794 = ssub.s32 %s13, 2
      // Predicated region
      $region57: #{decoder_block.1} parent=55 // pred_check
        %p795 = pneg %p194
      $region58: #{decoder_block.1} parent=55 // pred_check_branch
        %797 = sbr.rel (%p795) target = $region60
      $region59: #{decoder_block.1} parent=55 // pred_region
        %p798 = scmp.lt.s32.totalorder %s19, 1
        %s799 = scalar_select %p798, %s19, 1
        %s800 = smul.addr %s799, 2
        %s801 = smul.addr %s800, 8
        %s802 = scalar_lea.vmem %s7, %s801
      $region60: #{decoder_block.1} parent=55 // pred_fallthru
        _
    $region56: #{decoder_block.1} parent=5 // pred_fallthru
      _
  $region6: #{decoder_block.1} parent=0 // loop_footer
    %s17 = sadd.s32 1, %s13
  $region7: #{decoder_block.1} parent=0 // loop_footer_branch
    %12 = sbr.rel target = $region3
  $region8: #{decoder_block.1} parent=0 // loop_exit
    _

</llo_original>
